<compile_context>
chip_gen: v5e
topology: v5e:2x2
jax: 0.10.0
libtpu: 0.0.40
codegen_flags: <defaults>
</compile_context>

<pallas_src>
import jax
import jax.numpy as jnp
from jax.experimental import pallas as pl
from jax.experimental.pallas import tpu as pltpu


def _round_up(x, m):
    return ((x + m - 1) // m) * m


def critic_kernel(obs_ref, w1_ref, b1_ref, w2_ref, b2_ref, w3_ref, b3_ref, q_ref):
    # obs_ref: (TB, D)            w1_ref: (D, 64), w2_ref: (64, 64)  (matmul dtype, e.g. bf16)
    # b1/b2:   (1, 64) f32        w3_ref: (1, 64) f32                b3_ref: (1, 1) f32 in SMEM
    # q_ref:   (1, TB) f32        (batch on the lane axis -> dense stores)
    x = obs_ref[...].astype(w1_ref.dtype)                      # no-op if obs already bf16
    h1 = jnp.dot(x, w1_ref[...], preferred_element_type=jnp.float32)
    h1 = jnp.maximum(h1 + b1_ref[...], 0.0)                    # f32 on VPU
    h2 = jnp.dot(h1.astype(w2_ref.dtype), w2_ref[...],
                 preferred_element_type=jnp.float32)
    h2 = jnp.maximum(h2 + b2_ref[...], 0.0)                    # f32 on VPU
    # layer 3 (64 -> 1): elementwise multiply + lane reduction (MXU has nothing to gain here
    # without an explicit transpose of h2).
    q = jnp.sum(h2 * w3_ref[...], axis=-1) + b3_ref[0, 0]      # (TB,)
    q_ref[...] = q[None, :].astype(q_ref.dtype)                # lane-dense (1, TB) store


# Conservative per-grid-step live-VMEM budget for the obs tile + activations; safe with the
# 32 MiB scoped limit below on v5e / v6e / v7x (v7x: 64 MiB physical per TC).
_VMEM_TILE_BUDGET = 12 * 1024 * 1024


def critic_forward(obs, params, *, matmul_dtype=jnp.bfloat16, tb=None,
                   vmem_limit_bytes=32 * 1024 * 1024):
    """obs: (B, input_dims) float32 (bf16 also accepted). Returns q: (B, 1) float32."""
    w1, b1, w2, b2, w3, b3 = params
    B, D = obs.shape
    H1 = w1.shape[1]
    H2 = w2.shape[1]

    if tb is None:
        if B <= 1024:
            # Single grid step, full-array blocks (bypasses the (8,128) rule) -> no padding,
            # no pipeline setup overhead for small inference batches.
            tb = B
        else:
            # Size the batch tile from a VMEM budget:
            #   per-row bytes ~ double-buffered f32 obs (8D) + bf16 copy (2D) + f32 h1/h2 +
            #   bf16 h1 + temps  ~= 10*D + ~1 KiB.
            bytes_per_row = 10 * D + 1024
            tb = (_VMEM_TILE_BUDGET // bytes_per_row) // 128 * 128
            tb = max(256, min(tb, 8192))
            # Ensure >= 2 grid steps so the "parallel" axis uses both v7x TensorCores.
            tb = min(tb, _round_up((B + 1) // 2, 128))
    num_tiles = pl.cdiv(B, tb)
    # Only the (tiny) output row is padded; obs is left unpadded (ragged last tile reads
    # clamped/garbage rows whose q lanes land in the padded region and are sliced off).
    b_out = num_tiles * tb

    w1c = w1.astype(matmul_dtype)
    w2c = w2.astype(matmul_dtype)
    b1r = b1.reshape(1, H1).astype(jnp.float32)
    b2r = b2.reshape(1, H2).astype(jnp.float32)
    w3_row = w3.reshape(1, H2).astype(jnp.float32)   # (1, 64) broadcast row for the VPU
    b3_s = b3.reshape(1, 1).astype(jnp.float32)      # scalar -> SMEM

    q_row = pl.pallas_call(
        critic_kernel,
        out_shape=jax.ShapeDtypeStruct((1, b_out), jnp.float32),
        grid=(num_tiles,),
        in_specs=[
            pl.BlockSpec((tb, D), lambda i: (i, 0)),      # obs tile, pipelined over batch
            pl.BlockSpec((D, H1), lambda i: (0, 0)),      # w1 (VMEM-resident)
            pl.BlockSpec((1, H1), lambda i: (0, 0)),      # b1
            pl.BlockSpec((H1, H2), lambda i: (0, 0)),     # w2
            pl.BlockSpec((1, H2), lambda i: (0, 0)),      # b2
            pl.BlockSpec((1, H2), lambda i: (0, 0)),      # w3 as a row
            pl.BlockSpec(memory_space=pltpu.SMEM),        # b3 scalar
        ],
        out_specs=pl.BlockSpec((1, tb), lambda i: (0, i)),
        compiler_params=pltpu.CompilerParams(
            dimension_semantics=("parallel",),
            vmem_limit_bytes=vmem_limit_bytes,
        ),
    )(obs, w1c, b1r, w2c, b2r, w3_row, b3_s)

    return q_row[0, :B, None]                            # back to (B, 1)


def init_params(key, input_dims):
    """nn.Linear-style init: U(-1/sqrt(fan_in), 1/sqrt(fan_in)). Weights stored (in, out)."""
    ks = jax.random.split(key, 6)

    def linear(kw, kb, fan_in, fan_out):
        bound = 1.0 / jnp.sqrt(jnp.float32(fan_in))
        w = jax.random.uniform(kw, (fan_in, fan_out), jnp.float32, -bound, bound)
        b = jax.random.uniform(kb, (1, fan_out), jnp.float32, -bound, bound)
        return w, b

    w1, b1 = linear(ks[0], ks[1], input_dims, 64)
    w2, b2 = linear(ks[2], ks[3], 64, 64)
    w3, b3 = linear(ks[4], ks[5], 64, 1)
    return (w1, b1, w2, b2, w3, b3)


def critic_reference(obs, params, matmul_dtype=jnp.float32):
    """Pure-JAX reference mirroring the kernel's cast structure."""
    w1, b1, w2, b2, w3, b3 = params
    hp = jax.lax.Precision.HIGHEST
    x = obs.astype(matmul_dtype)
    h1 = jnp.maximum(
        jnp.dot(x, w1.astype(matmul_dtype),
                preferred_element_type=jnp.float32, precision=hp) + b1, 0.0)
    h2 = jnp.maximum(
        jnp.dot(h1.astype(matmul_dtype), w2.astype(matmul_dtype),
                preferred_element_type=jnp.float32, precision=hp) + b2, 0.0)
    q = jnp.sum(h2 * w3.reshape(1, -1), axis=-1, keepdims=True) + b3
    return q


if __name__ == "__main__":
    key = jax.random.PRNGKey(0)
    k_obs, k_par, k_big = jax.random.split(key, 3)

    input_dims = 32
    params = init_params(k_par, input_dims)

    # Small batch (the original use case): single grid step, full-array blocks, no padding.
    batch = 8
    obs = jax.random.normal(k_obs, (batch, input_dims), dtype=jnp.float32)

    # Default (bf16-matmul) path — fast path for v6e/v7x MXUs.
    q = jax.block_until_ready(critic_forward(obs, params))
    assert q.shape == (batch, 1)
    q_ref_bf16 = critic_reference(obs, params, matmul_dtype=jnp.bfloat16)
    assert jnp.allclose(q, q_ref_bf16, atol=2e-2, rtol=2e-2), (
        f"bf16 path mismatch, max err {jnp.max(jnp.abs(q - q_ref_bf16))}")

    # Full-f32 path matches the original module numerics closely.
    q32 = jax.block_until_ready(critic_forward(obs, params, matmul_dtype=jnp.float32))
    q_ref_f32 = critic_reference(obs, params, matmul_dtype=jnp.float32)
    assert jnp.allclose(q32, q_ref_f32, atol=2e-3, rtol=2e-3), (
        f"f32 path mismatch, max err {jnp.max(jnp.abs(q32 - q_ref_f32))}")

    # Larger batch: exercises the tiled path (>=2 grid steps, ragged last obs tile, no jnp.pad).
    big_b = 2000
    obs_big = jax.random.normal(k_big, (big_b, input_dims), dtype=jnp.float32)
    q_big = jax.block_until_ready(critic_forward(obs_big, params))
    assert q_big.shape == (big_b, 1)
    q_big_ref = critic_reference(obs_big, params, matmul_dtype=jnp.bfloat16)
    assert jnp.allclose(q_big, q_big_ref, atol=2e-2, rtol=2e-2), (
        f"tiled path mismatch, max err {jnp.max(jnp.abs(q_big - q_big_ref))}")

    print("KERNEL_OK")
</pallas_src>

<mosaic_0001>
module attributes {stable_mosaic.version = 11 : i64} {
  func.func @critic_kernel(%arg0: i32, %arg1: memref<8x32xf32, #tpu.memory_space<vmem>>, %arg2: memref<32x64xbf16, #tpu.memory_space<vmem>>, %arg3: memref<1x64xf32, #tpu.memory_space<vmem>>, %arg4: memref<64x64xbf16, #tpu.memory_space<vmem>>, %arg5: memref<1x64xf32, #tpu.memory_space<vmem>>, %arg6: memref<1x64xf32, #tpu.memory_space<vmem>>, %arg7: memref<1x1xf32, #tpu.memory_space<smem>>, %arg8: memref<1x8xf32, #tpu.memory_space<vmem>>) attributes {dimension_semantics = [#tpu.dimension_semantics<parallel>], iteration_bounds = array<i64: 1>, scalar_prefetch = 0 : i64, scratch_operands = 0 : i64, tpu.core_type = #tpu.core_type<tc>, window_params = [{transform_indices = @transform_0, window_bounds = array<i64: 8, 32>}, {pipeline_mode = #tpu.pipeline_mode<synchronous>, transform_indices = @transform_1, window_bounds = array<i64: 32, 64>}, {pipeline_mode = #tpu.pipeline_mode<synchronous>, transform_indices = @transform_2, window_bounds = array<i64: 1, 64>}, {pipeline_mode = #tpu.pipeline_mode<synchronous>, transform_indices = @transform_3, window_bounds = array<i64: 64, 64>}, {pipeline_mode = #tpu.pipeline_mode<synchronous>, transform_indices = @transform_4, window_bounds = array<i64: 1, 64>}, {pipeline_mode = #tpu.pipeline_mode<synchronous>, transform_indices = @transform_5, window_bounds = array<i64: 1, 64>}, {transform_indices = @transform_6, window_bounds = array<i64: 1, 1>}, {transform_indices = @transform_7, window_bounds = array<i64: 1, 8>}]} {
    %c0 = arith.constant 0 : index
    %c0_0 = arith.constant 0 : index
    %0 = vector.load %arg1[%c0, %c0_0] : memref<8x32xf32, #tpu.memory_space<vmem>>, vector<8x32xf32>
    %1 = arith.truncf %0 : vector<8x32xf32> to vector<8x32xbf16>
    %c0_1 = arith.constant 0 : index
    %c0_2 = arith.constant 0 : index
    %2 = vector.load %arg2[%c0_1, %c0_2] : memref<32x64xbf16, #tpu.memory_space<vmem>>, vector<32x64xbf16>
    %cst = arith.constant dense<0.000000e+00> : vector<8x64xf32>
    %3 = tpu.matmul %1, %2, %cst {dimension_numbers = #tpu.dot_dimension_numbers<[1], [0], [0], [1], [0, 0, 1, 1], [], []>} : vector<8x32xbf16>, vector<32x64xbf16>, vector<8x64xf32> -> vector<8x64xf32>
    %c0_3 = arith.constant 0 : index
    %c0_4 = arith.constant 0 : index
    %4 = vector.load %arg3[%c0_3, %c0_4] : memref<1x64xf32, #tpu.memory_space<vmem>>, vector<1x64xf32>
    %5 = vector.broadcast %4 : vector<1x64xf32> to vector<8x64xf32>
    %6 = arith.addf %3, %5 : vector<8x64xf32>
    %cst_5 = arith.constant 0.000000e+00 : f32
    %7 = vector.broadcast %cst_5 : f32 to vector<8x64xf32>
    %8 = arith.maximumf %6, %7 : vector<8x64xf32>
    %9 = arith.truncf %8 : vector<8x64xf32> to vector<8x64xbf16>
    %c0_6 = arith.constant 0 : index
    %c0_7 = arith.constant 0 : index
    %10 = vector.load %arg4[%c0_6, %c0_7] : memref<64x64xbf16, #tpu.memory_space<vmem>>, vector<64x64xbf16>
    %cst_8 = arith.constant dense<0.000000e+00> : vector<8x64xf32>
    %11 = tpu.matmul %9, %10, %cst_8 {dimension_numbers = #tpu.dot_dimension_numbers<[1], [0], [0], [1], [0, 0, 1, 1], [], []>} : vector<8x64xbf16>, vector<64x64xbf16>, vector<8x64xf32> -> vector<8x64xf32>
    %c0_9 = arith.constant 0 : index
    %c0_10 = arith.constant 0 : index
    %12 = vector.load %arg5[%c0_9, %c0_10] : memref<1x64xf32, #tpu.memory_space<vmem>>, vector<1x64xf32>
    %13 = vector.broadcast %12 : vector<1x64xf32> to vector<8x64xf32>
    %14 = arith.addf %11, %13 : vector<8x64xf32>
    %cst_11 = arith.constant 0.000000e+00 : f32
    %15 = vector.broadcast %cst_11 : f32 to vector<8x64xf32>
    %16 = arith.maximumf %14, %15 : vector<8x64xf32>
    %c0_12 = arith.constant 0 : index
    %c0_13 = arith.constant 0 : index
    %17 = vector.load %arg6[%c0_12, %c0_13] : memref<1x64xf32, #tpu.memory_space<vmem>>, vector<1x64xf32>
    %18 = vector.broadcast %17 : vector<1x64xf32> to vector<8x64xf32>
    %19 = arith.mulf %16, %18 : vector<8x64xf32>
    %cst_14 = arith.constant dense<0.000000e+00> : vector<8xf32>
    %20 = vector.multi_reduction <add>, %19, %cst_14 [1] : vector<8x64xf32> to vector<8xf32>
    %c0_15 = arith.constant 0 : index
    %c0_16 = arith.constant 0 : index
    %21 = memref.load %arg7[%c0_15, %c0_16] : memref<1x1xf32, #tpu.memory_space<smem>>
    %22 = vector.broadcast %21 : f32 to vector<8xf32>
    %23 = arith.addf %20, %22 : vector<8xf32>
    %24 = vector.shape_cast %23 : vector<8xf32> to vector<1x8xf32>
    %c0_17 = arith.constant 0 : index
    %c0_18 = arith.constant 0 : index
    %25 = vector.load %arg8[%c0_17, %c0_18] : memref<1x8xf32, #tpu.memory_space<vmem>>, vector<1x8xf32>
    tpu.vector_store %arg8[%c0_17, %c0_18], %24 {strides = array<i32>} : memref<1x8xf32, #tpu.memory_space<vmem>>, vector<1x8xf32>,
    return
  }
  func.func @transform_0(%arg0: i32) -> (i32, i32) {
    %c0_i32 = arith.constant 0 : i32
    %c0_i32_0 = arith.constant 0 : i32
    return %arg0, %c0_i32 : i32, i32
  }
  func.func @transform_1(%arg0: i32) -> (i32, i32) {
    %c0_i32 = arith.constant 0 : i32
    %c0_i32_0 = arith.constant 0 : i32
    %c0_i32_1 = arith.constant 0 : i32
    return %c0_i32, %c0_i32_0 : i32, i32
  }
  func.func @transform_2(%arg0: i32) -> (i32, i32) {
    %c0_i32 = arith.constant 0 : i32
    %c0_i32_0 = arith.constant 0 : i32
    %c0_i32_1 = arith.constant 0 : i32
    return %c0_i32, %c0_i32_0 : i32, i32
  }
  func.func @transform_3(%arg0: i32) -> (i32, i32) {
    %c0_i32 = arith.constant 0 : i32
    %c0_i32_0 = arith.constant 0 : i32
    %c0_i32_1 = arith.constant 0 : i32
    return %c0_i32, %c0_i32_0 : i32, i32
  }
  func.func @transform_4(%arg0: i32) -> (i32, i32) {
    %c0_i32 = arith.constant 0 : i32
    %c0_i32_0 = arith.constant 0 : i32
    %c0_i32_1 = arith.constant 0 : i32
    return %c0_i32, %c0_i32_0 : i32, i32
  }
  func.func @transform_5(%arg0: i32) -> (i32, i32) {
    %c0_i32 = arith.constant 0 : i32
    %c0_i32_0 = arith.constant 0 : i32
    %c0_i32_1 = arith.constant 0 : i32
    return %c0_i32, %c0_i32_0 : i32, i32
  }
  func.func @transform_6(%arg0: i32) -> (i32, i32) {
    %c0_i32 = arith.constant 0 : i32
    %c0_i32_0 = arith.constant 0 : i32
    %c0_i32_1 = arith.constant 0 : i32
    return %c0_i32, %c0_i32_0 : i32, i32
  }
  func.func @transform_7(%arg0: i32) -> (i32, i32) {
    %c0_i32 = arith.constant 0 : i32
    %c0_i32_0 = arith.constant 0 : i32
    return %c0_i32, %arg0 : i32, i32
  }
}

</mosaic_0001>

<llo_original>
// kernel: tpu_custom_call.1
$region0: #{tpu_custom_call.1}
  #allocation0 [shape = 'u32[]', space=smem, size = 0x4, offset = 0x4, fixed_abs, tag = 'smem constant byte address 0x4 - core index']
  #allocation1 [shape = 'u32[72,128]{1,0:T(1,128)}', space=vmem, size = 0x9000, scoped, tag = 'internal scratch']
  #allocation2 [shape = 'f32[1,1]{1,0:T(1,128)S(6)}', space=smem, size = 0x200, scoped, tag = 'scoped memory for tpu_custom_call.1']
  %s0 = inlined_call_operand.hbm [shape: f32[8,32], index: 0, kind: input, shape index: {}]
  %s1 = inlined_call_operand.hbm [shape: bf16[32,64], index: 1, kind: input, shape index: {}]
  %s2 = inlined_call_operand.vmem [shape: f32[1,64], index: 2, kind: input, shape index: {}]
  %s3 = inlined_call_operand.hbm [shape: bf16[64,64], index: 3, kind: input, shape index: {}]
  %s4 = inlined_call_operand.vmem [shape: f32[1,64], index: 4, kind: input, shape index: {}]
  %s5 = inlined_call_operand.vmem [shape: f32[1,64], index: 5, kind: input, shape index: {}]
  %s6 = inlined_call_operand.<no memory space> [shape: f32[1,1], index: 6, kind: input, shape index: {}]
  %s7 = inlined_call_operand.hbm [shape: f32[1,8], index: 7, kind: output, shape index: {}]
  %s8 = sld [smem:[#allocation0]]
  $region50: #{tpu_custom_call.1} parent=0
    _
  %s10 = ssub.s32 1, %s8
  %s11 = scalar_select 0, %s10, %s8
  %12 = sst [smem:[#allocation2]] %s6
  $region1: #{tpu_custom_call.1} parent=0
    #allocation3 [shape = 'u8[4096]{0}', space=vmem, size = 0x1000, scoped, tag = 'input window, operand 0, single buffered']
    #allocation4 [shape = 's32[1]{0}', space=sflag, size = 0x4, scoped, tag = 'scoped memory for tpu_custom_call.1']
    #allocation5 [shape = 's32[1]{0}', space=sflag, size = 0x4, scoped, tag = 'scoped memory for tpu_custom_call.1']
    #allocation6 [shape = 'u8[8192]{0}', space=vmem, size = 0x2000, scoped, tag = 'input window, operand 1, single buffered']
    #allocation7 [shape = 's32[1]{0}', space=sflag, size = 0x4, scoped, tag = 'scoped memory for tpu_custom_call.1']
    #allocation8 [shape = 'u8[16384]{0}', space=vmem, size = 0x4000, scoped, tag = 'input window, operand 3, single buffered']
    #allocation9 [shape = 'u8[512]{0}', space=vmem, size = 0x400, scoped, tag = 'output window, operand 0, single buffered']
    %13 = vsyncpa [#allocation4], 0
    %14 = vsyncpa [#allocation7], 0
    %15 = vsyncpa [#allocation5], 0
    // Predicated region
    $region2: #{tpu_custom_call.1} parent=1 // pred_check
      _
    $region3: #{tpu_custom_call.1} parent=1 // pred_check_branch
      %17 = sbr.rel (0) target = $region5
    $region4: #{tpu_custom_call.1} parent=1 // pred_region
      %19 = vsyncadd [#allocation4], 0
      %s21 = sshll.u32 %s0, 4
      %s22 = int_to_ptr.hbm [resolvable:$true] %s21
      %s23 = sshll.u32 [#allocation3], 4
      %s24 = int_to_ptr.vmem [resolvable:$true] %s23
      %26 = dma.hbm_to_vmem [thread:$0]  %s22, 128, %s24, [#allocation4]
    $region5: #{tpu_custom_call.1} parent=1 // pred_fallthru
      _
    // Predicated region
    $region6: #{tpu_custom_call.1} parent=1 // pred_check
      _
    $region7: #{tpu_custom_call.1} parent=1 // pred_check_branch
      %28 = sbr.rel (0) target = $region9
    $region8: #{tpu_custom_call.1} parent=1 // pred_region
      %30 = vsyncadd [#allocation7], 0
      %s31 = sshll.u32 %s1, 4
      %s32 = int_to_ptr.hbm [resolvable:$true] %s31
      %s33 = sshll.u32 [#allocation6], 4
      %s34 = int_to_ptr.vmem [resolvable:$true] %s33
      %39 = dma.hbm_to_vmem [thread:$0]  %s32, 256, %s34, [#allocation7], 64, 64, 4
    $region9: #{tpu_custom_call.1} parent=1 // pred_fallthru
      _
    // Predicated region
    $region10: #{tpu_custom_call.1} parent=1 // pred_check
      _
    $region11: #{tpu_custom_call.1} parent=1 // pred_check_branch
      %41 = sbr.rel (0) target = $region13
    $region12: #{tpu_custom_call.1} parent=1 // pred_region
      _
    $region13: #{tpu_custom_call.1} parent=1 // pred_fallthru
      _
    // Predicated region
    $region14: #{tpu_custom_call.1} parent=1 // pred_check
      _
    $region15: #{tpu_custom_call.1} parent=1 // pred_check_branch
      %43 = sbr.rel (0) target = $region17
    $region16: #{tpu_custom_call.1} parent=1 // pred_region
      %45 = vsyncadd [#allocation7], 0
      %s46 = sshll.u32 %s3, 4
      %s47 = int_to_ptr.hbm [resolvable:$true] %s46
      %s48 = sshll.u32 [#allocation8], 4
      %s49 = int_to_ptr.vmem [resolvable:$true] %s48
      %54 = dma.hbm_to_vmem [thread:$0]  %s47, 512, %s49, [#allocation7], 64, 64, 4
    $region17: #{tpu_custom_call.1} parent=1 // pred_fallthru
      _
    // Predicated region
    $region18: #{tpu_custom_call.1} parent=1 // pred_check
      _
    $region19: #{tpu_custom_call.1} parent=1 // pred_check_branch
      %56 = sbr.rel (0) target = $region21
    $region20: #{tpu_custom_call.1} parent=1 // pred_region
      _
    $region21: #{tpu_custom_call.1} parent=1 // pred_fallthru
      _
    // Predicated region
    $region22: #{tpu_custom_call.1} parent=1 // pred_check
      _
    $region23: #{tpu_custom_call.1} parent=1 // pred_check_branch
      %58 = sbr.rel (0) target = $region25
    $region24: #{tpu_custom_call.1} parent=1 // pred_region
      _
    $region25: #{tpu_custom_call.1} parent=1 // pred_fallthru
      _
    // Predicated region
    $region26: #{tpu_custom_call.1} parent=1 // pred_check
      _
    $region27: #{tpu_custom_call.1} parent=1 // pred_check_branch
      %60 = sbr.rel (0) target = $region29
    $region28: #{tpu_custom_call.1} parent=1 // pred_region
      _
    $region29: #{tpu_custom_call.1} parent=1 // pred_fallthru
      _
    // Predicated region
    $region30: #{tpu_custom_call.1} parent=1 // pred_check
      _
    $region31: #{tpu_custom_call.1} parent=1 // pred_check_branch
      %62 = sbr.rel (0) target = $region33
    $region32: #{tpu_custom_call.1} parent=1 // pred_region
      %64 = dma.done [#allocation4], 128
    $region33: #{tpu_custom_call.1} parent=1 // pred_fallthru
      _
    // Predicated region
    $region34: #{tpu_custom_call.1} parent=1 // pred_check
      _
    $region35: #{tpu_custom_call.1} parent=1 // pred_check_branch
      %66 = sbr.rel (0) target = $region37
    $region36: #{tpu_custom_call.1} parent=1 // pred_region
      %68 = dma.done [#allocation7], 256
    $region37: #{tpu_custom_call.1} parent=1 // pred_fallthru
      _
    // Predicated region
    $region38: #{tpu_custom_call.1} parent=1 // pred_check
      _
    $region39: #{tpu_custom_call.1} parent=1 // pred_check_branch
      %70 = sbr.rel (0) target = $region41
    $region40: #{tpu_custom_call.1} parent=1 // pred_region
      %72 = dma.done [#allocation7], 512
    $region41: #{tpu_custom_call.1} parent=1 // pred_fallthru
      _
    %v74 = vld [vmem:[#allocation3] sm:$0xff]
    %v75 = vpack.c.bf16 %v74, %v74
    %v76 = vld [vmem:[#allocation6] sm:$0xf]
    %v77 = vld [vmem:[#allocation6 + $0x4] sm:$0xf]
    %v78 = vld [vmem:[#allocation6 + $0x8] sm:$0xf]
    %v79 = vld [vmem:[#allocation6 + $0xc] sm:$0xf]
    %v80 = vld [vmem:[%s2] sm:$0x1]
    %v82 = vperm.slane %v80, 0
    %v88 = vunpack.c.l.b16 %v76
    %v89 = vunpack.c.l.b16 %v77
    %v90 = vunpack.c.l.b16 %v78
    %v91 = vunpack.c.l.b16 %v79
    %v92 = vpack.c.b16 %v89, %v88
    %v93 = vpack.c.b16 %v91, %v90
    %vm96 = vcmask 261120
    %v98 = vsel %vm96, %v75, 0
    %100 = vmatpush.bf16.msra.mxu0 0
    %101 = vmatpush.bf16.msra.mxu0 0
    %102 = vmatpush.bf16.msra.mxu0 0
    %103 = vmatpush.bf16.msra.mxu0 0
    %104 = vmatpush.bf16.msra.mxu0 0
    %105 = vmatpush.bf16.msra.mxu0 0
    %106 = vmatpush.bf16.msra.mxu0 %v93
    %107 = vmatpush.bf16.msra.mxu0 %v92
    %108 = vmatmul.bf16.gmra.mxu0 %v98
    %v109 = vpop.f32.mrf.mxu0
    %v110 = vadd.f32 %v82, %v109
    %v111 = vpop.f32.mrf.mxu0
    %112 = vdwg.mxu0
    %v113 = vmax.f32 %v110, 0.0
    %v114 = vpack.c.bf16 %v113, %v113
    %v115 = vld [vmem:[#allocation8] sm:$0xf]
    %v116 = vld [vmem:[#allocation8 + $0x4] sm:$0xf]
    %v117 = vld [vmem:[#allocation8 + $0x8] sm:$0xf]
    %v118 = vld [vmem:[#allocation8 + $0xc] sm:$0xf]
    %v119 = vld [vmem:[#allocation8 + $0x10] sm:$0xf]
    %v120 = vld [vmem:[#allocation8 + $0x14] sm:$0xf]
    %v121 = vld [vmem:[#allocation8 + $0x18] sm:$0xf]
    %v122 = vld [vmem:[#allocation8 + $0x1c] sm:$0xf]
    %v123 = vld [vmem:[%s4] sm:$0x1]
    %v125 = vperm.slane %v123, 0
    %v135 = vunpack.c.l.b16 %v115
    %v136 = vunpack.c.l.b16 %v116
    %v137 = vunpack.c.l.b16 %v117
    %v138 = vunpack.c.l.b16 %v118
    %v139 = vunpack.c.l.b16 %v119
    %v140 = vunpack.c.l.b16 %v120
    %v141 = vunpack.c.l.b16 %v121
    %v142 = vunpack.c.l.b16 %v122
    %v143 = vpack.c.b16 %v136, %v135
    %v144 = vpack.c.b16 %v138, %v137
    %v145 = vpack.c.b16 %v140, %v139
    %v146 = vpack.c.b16 %v142, %v141
    %vm151 = vcmask 523264
    %v153 = vsel %vm151, %v114, 0
    %155 = vmatpush.bf16.msra.mxu0 0
    %156 = vmatpush.bf16.msra.mxu0 0
    %157 = vmatpush.bf16.msra.mxu0 0
    %158 = vmatpush.bf16.msra.mxu0 0
    %159 = vmatpush.bf16.msra.mxu0 %v146
    %160 = vmatpush.bf16.msra.mxu0 %v145
    %161 = vmatpush.bf16.msra.mxu0 %v144
    %162 = vmatpush.bf16.msra.mxu0 %v143
    %163 = vmatmul.bf16.gmra.mxu0 %v153
    %v164 = vpop.f32.mrf.mxu0
    %v165 = vadd.f32 %v125, %v164
    %v166 = vpop.f32.mrf.mxu0
    %167 = vdwg.mxu0
    %v168 = vmax.f32 %v165, 0.0
    %v169 = vld [vmem:[%s5] sm:$0x1]
    %v171 = vperm.slane %v169, 0
    %v173 = vmul.f32 %v168, %v171
    %v174 = vsel %vm151, %v173, 0.0
    %175 = vadd.xlane.f32.xlu0 %v174
    %v176 = vpop.xlane.xlu0 %175
    %s177 = sld [smem:[#allocation2]]
    %v178 = vstv %s177
    %v179 = vadd.f32 %v176, %v178
    %v181 = vlaneseq
    %v182 = vand.u32 %v181, 127
    %v183 = vperm.slane %v179, %v182
    %vm185 = vcmask 57344
    %186 = vst.msk [vmem:[#allocation9] sm:$0x1] %vm185, %v183
    // Predicated region
    $region42: #{tpu_custom_call.1} parent=1 // pred_check
      _
    $region43: #{tpu_custom_call.1} parent=1 // pred_check_branch
      %188 = sbr.rel (0) target = $region45
    $region44: #{tpu_custom_call.1} parent=1 // pred_region
      %190 = vsyncadd [#allocation5], 0
      %s192 = sshll.u32 [#allocation9], 4
      %s193 = int_to_ptr.vmem [resolvable:$true] %s192
      %s194 = sshll.u32 %s7, 4
      %s195 = int_to_ptr.hbm [resolvable:$true] %s194
      %197 = dma.vmem_to_hbm [thread:$0]  %s193, 16, %s195, [#allocation5]
    $region45: #{tpu_custom_call.1} parent=1 // pred_fallthru
      _
    // Predicated region
    $region46: #{tpu_custom_call.1} parent=1 // pred_check
      _
    $region47: #{tpu_custom_call.1} parent=1 // pred_check_branch
      %199 = sbr.rel (0) target = $region49
    $region48: #{tpu_custom_call.1} parent=1 // pred_region
      %201 = dma.done [#allocation5], 16
    $region49: #{tpu_custom_call.1} parent=1 // pred_fallthru
      _
    %202 = vsyncpa [#allocation4], 1
    %203 = vsyncpa [#allocation7], 1
    %204 = vsyncpa [#allocation5], 1

</llo_original>
